<compile_context>
chip_gen: v7x
topology: tpu7x:2x2x1
jax: 0.10.0
libtpu: 0.0.40
codegen_flags: <defaults>
</compile_context>

<pallas_src>
import jax
import jax.numpy as jnp
from jax.experimental import pallas as pl
from jax.experimental.pallas import tpu as pltpu


def _series_decomp_kernel(a_ref, x_ref, res_ref, mean_ref):
    # a_ref: (L, L) f32 averaging matrix (replicate padding baked in).
    # x_ref / res_ref / mean_ref: (Bb, L, C).
    A = a_ref[...]
    nb = x_ref.shape[0]
    for b in range(nb):  # static unroll; Bb is small, keeps LLO scheduler visibility
        xb = x_ref[b].astype(jnp.float32)                       # (L, C), f32
        m = jnp.dot(A, xb, preferred_element_type=jnp.float32)  # MXU sliding-window reduction
        mean_ref[b] = m.astype(mean_ref.dtype)
        res_ref[b] = (xb - m).astype(res_ref.dtype)


def _build_avg_matrix(L, kernel_size):
    """A[t, j] = weight of x[j] in the replicate-padded k-tap average at time t."""
    pad = (kernel_size - 1) // 2
    t = jnp.arange(L, dtype=jnp.int32)[:, None]
    j = jnp.arange(L, dtype=jnp.int32)[None, :]
    band = (jnp.abs(t - j) <= pad).astype(jnp.float32)                    # in-range taps
    left_extra = jnp.maximum(0, pad - t).astype(jnp.float32)              # taps clamped to 0
    right_extra = jnp.maximum(0, t + pad - (L - 1)).astype(jnp.float32)   # taps clamped to L-1
    A = band.at[:, 0].add(left_extra[:, 0])
    A = A.at[:, L - 1].add(right_extra[:, 0])
    return A / float(kernel_size)


def _pick_batch_block(B, L, C, itemsize, budget_bytes=4 << 20, max_rows_cap=16):
    """Largest divisor of B fitting a VMEM budget; keep >= 2 grid steps if possible."""
    row_bytes = max(1, L * C * itemsize)
    # input block + 2 output blocks, double-buffered  ->  ~6x the input footprint.
    max_rows = max(1, min(max_rows_cap, budget_bytes // (6 * row_bytes)))
    bb = 1
    for d in range(1, B + 1):
        if B % d == 0 and d <= max_rows:
            bb = d
    if bb == B and B > 1:
        # keep at least 2 grid steps so ("parallel",) can shard across TensorCores.
        for d in range(B // 2, 0, -1):
            if B % d == 0:
                bb = d
                break
    return bb


def series_decomp(x, kernel_size):
    """x: [B, L, C] -> (res, moving_mean), both [B, L, C].  kernel_size must be odd."""
    assert kernel_size >= 1 and kernel_size % 2 == 1, (
        "Pallas series_decomp matches the PyTorch module only for odd kernel_size")
    B, L, C = x.shape
    A = _build_avg_matrix(L, kernel_size)          # (L, L) f32, tiny, lives in VMEM
    Bb = _pick_batch_block(B, L, C, x.dtype.itemsize)
    grid = (B // Bb,)

    res, mean = pl.pallas_call(
        _series_decomp_kernel,
        out_shape=(
            jax.ShapeDtypeStruct((B, L, C), x.dtype),
            jax.ShapeDtypeStruct((B, L, C), x.dtype),
        ),
        grid_spec=pltpu.PrefetchScalarGridSpec(
            num_scalar_prefetch=0,
            grid=grid,
            in_specs=[
                pl.BlockSpec((L, L), lambda b: (0, 0)),         # A: same block every step
                pl.BlockSpec((Bb, L, C), lambda b: (b, 0, 0)),  # x, read directly (no pad copy)
            ],
            out_specs=[
                pl.BlockSpec((Bb, L, C), lambda b: (b, 0, 0)),
                pl.BlockSpec((Bb, L, C), lambda b: (b, 0, 0)),
            ],
        ),
        compiler_params=pltpu.CompilerParams(
            dimension_semantics=("parallel",),
            vmem_limit_bytes=32 * 1024 * 1024,
        ),
    )(A, x)
    return res, mean


def _reference(x, kernel_size):
    """Pure-JAX reference mirroring the PyTorch forward (odd kernel_size)."""
    pad = (kernel_size - 1) // 2
    front = jnp.repeat(x[:, 0:1, :], pad, axis=1)
    end = jnp.repeat(x[:, -1:, :], pad, axis=1)
    xpad = jnp.concatenate([front, x, end], axis=1)
    L = x.shape[1]
    windows = jnp.stack([xpad[:, i:i + L, :] for i in range(kernel_size)], axis=0)
    mean = jnp.mean(windows, axis=0)
    return x - mean, mean


if __name__ == "__main__":
    KERNEL_SIZE = 25          # DLinear default; must be odd
    B, L, C = 4, 128, 8       # small [batch, seq_len, channels]

    key = jax.random.PRNGKey(0)
    x = jax.random.normal(key, (B, L, C), dtype=jnp.float32)

    res, mean = series_decomp(x, KERNEL_SIZE)
    jax.block_until_ready((res, mean))

    res_ref, mean_ref = _reference(x, KERNEL_SIZE)
    assert jnp.allclose(mean, mean_ref, atol=1e-4, rtol=1e-4)
    assert jnp.allclose(res, res_ref, atol=1e-4, rtol=1e-4)
    assert jnp.allclose(res + mean, x, atol=1e-4, rtol=1e-4)

    print("KERNEL_OK")
</pallas_src>

<mosaic_0001>
module attributes {stable_mosaic.version = 11 : i64} {
  func.func @_series_decomp_kernel(%arg0: i32, %arg1: memref<128x128xf32, #tpu.memory_space<vmem>>, %arg2: memref<2x128x8xf32, #tpu.memory_space<vmem>>, %arg3: memref<2x128x8xf32, #tpu.memory_space<vmem>>, %arg4: memref<2x128x8xf32, #tpu.memory_space<vmem>>) attributes {dimension_semantics = [#tpu.dimension_semantics<parallel>], iteration_bounds = array<i64: 2>, scalar_prefetch = 0 : i64, scratch_operands = 0 : i64, tpu.core_type = #tpu.core_type<tc>, window_params = [{pipeline_mode = #tpu.pipeline_mode<synchronous>, transform_indices = @transform_0, window_bounds = array<i64: 128, 128>}, {transform_indices = @transform_1, window_bounds = array<i64: 2, 128, 8>}, {transform_indices = @transform_2, window_bounds = array<i64: 2, 128, 8>}, {transform_indices = @transform_3, window_bounds = array<i64: 2, 128, 8>}]} {
    %c0 = arith.constant 0 : index
    %c0_0 = arith.constant 0 : index
    %0 = vector.load %arg1[%c0, %c0_0] : memref<128x128xf32, #tpu.memory_space<vmem>>, vector<128x128xf32>
    %c0_1 = arith.constant 0 : index
    %c0_2 = arith.constant 0 : index
    %c0_3 = arith.constant 0 : index
    %1 = vector.load %arg2[%c0_1, %c0_2, %c0_3] : memref<2x128x8xf32, #tpu.memory_space<vmem>>, vector<1x128x8xf32>
    %2 = vector.shape_cast %1 : vector<1x128x8xf32> to vector<128x8xf32>
    %cst = arith.constant dense<0.000000e+00> : vector<128x8xf32>
    %3 = tpu.matmul %0, %2, %cst {dimension_numbers = #tpu.dot_dimension_numbers<[1], [0], [0], [1], [0, 0, 1, 1], [], []>} : vector<128x128xf32>, vector<128x8xf32>, vector<128x8xf32> -> vector<128x8xf32>
    %c0_4 = arith.constant 0 : index
    %c0_5 = arith.constant 0 : index
    %c0_6 = arith.constant 0 : index
    %4 = vector.load %arg4[%c0_4, %c0_5, %c0_6] : memref<2x128x8xf32, #tpu.memory_space<vmem>>, vector<1x128x8xf32>
    %5 = vector.shape_cast %4 : vector<1x128x8xf32> to vector<128x8xf32>
    %6 = vector.shape_cast %3 : vector<128x8xf32> to vector<1x128x8xf32>
    tpu.vector_store %arg4[%c0_4, %c0_5, %c0_6], %6 {strides = array<i32>} : memref<2x128x8xf32, #tpu.memory_space<vmem>>, vector<1x128x8xf32>,
    %7 = arith.subf %2, %3 : vector<128x8xf32>
    %c0_7 = arith.constant 0 : index
    %c0_8 = arith.constant 0 : index
    %c0_9 = arith.constant 0 : index
    %8 = vector.load %arg3[%c0_7, %c0_8, %c0_9] : memref<2x128x8xf32, #tpu.memory_space<vmem>>, vector<1x128x8xf32>
    %9 = vector.shape_cast %8 : vector<1x128x8xf32> to vector<128x8xf32>
    %10 = vector.shape_cast %7 : vector<128x8xf32> to vector<1x128x8xf32>
    tpu.vector_store %arg3[%c0_7, %c0_8, %c0_9], %10 {strides = array<i32>} : memref<2x128x8xf32, #tpu.memory_space<vmem>>, vector<1x128x8xf32>,
    %c1 = arith.constant 1 : index
    %c0_10 = arith.constant 0 : index
    %c0_11 = arith.constant 0 : index
    %11 = vector.load %arg2[%c1, %c0_10, %c0_11] : memref<2x128x8xf32, #tpu.memory_space<vmem>>, vector<1x128x8xf32>
    %12 = vector.shape_cast %11 : vector<1x128x8xf32> to vector<128x8xf32>
    %cst_12 = arith.constant dense<0.000000e+00> : vector<128x8xf32>
    %13 = tpu.matmul %0, %12, %cst_12 {dimension_numbers = #tpu.dot_dimension_numbers<[1], [0], [0], [1], [0, 0, 1, 1], [], []>} : vector<128x128xf32>, vector<128x8xf32>, vector<128x8xf32> -> vector<128x8xf32>
    %c1_13 = arith.constant 1 : index
    %c0_14 = arith.constant 0 : index
    %c0_15 = arith.constant 0 : index
    %14 = vector.load %arg4[%c1_13, %c0_14, %c0_15] : memref<2x128x8xf32, #tpu.memory_space<vmem>>, vector<1x128x8xf32>
    %15 = vector.shape_cast %14 : vector<1x128x8xf32> to vector<128x8xf32>
    %16 = vector.shape_cast %13 : vector<128x8xf32> to vector<1x128x8xf32>
    tpu.vector_store %arg4[%c1_13, %c0_14, %c0_15], %16 {strides = array<i32>} : memref<2x128x8xf32, #tpu.memory_space<vmem>>, vector<1x128x8xf32>,
    %17 = arith.subf %12, %13 : vector<128x8xf32>
    %c1_16 = arith.constant 1 : index
    %c0_17 = arith.constant 0 : index
    %c0_18 = arith.constant 0 : index
    %18 = vector.load %arg3[%c1_16, %c0_17, %c0_18] : memref<2x128x8xf32, #tpu.memory_space<vmem>>, vector<1x128x8xf32>
    %19 = vector.shape_cast %18 : vector<1x128x8xf32> to vector<128x8xf32>
    %20 = vector.shape_cast %17 : vector<128x8xf32> to vector<1x128x8xf32>
    tpu.vector_store %arg3[%c1_16, %c0_17, %c0_18], %20 {strides = array<i32>} : memref<2x128x8xf32, #tpu.memory_space<vmem>>, vector<1x128x8xf32>,
    return
  }
  func.func @transform_0(%arg0: i32) -> (i32, i32) {
    %c0_i32 = arith.constant 0 : i32
    %c0_i32_0 = arith.constant 0 : i32
    %c0_i32_1 = arith.constant 0 : i32
    return %c0_i32, %c0_i32_0 : i32, i32
  }
  func.func @transform_1(%arg0: i32) -> (i32, i32, i32) {
    %c0_i32 = arith.constant 0 : i32
    %c0_i32_0 = arith.constant 0 : i32
    %c0_i32_1 = arith.constant 0 : i32
    return %arg0, %c0_i32, %c0_i32_0 : i32, i32, i32
  }
  func.func @transform_2(%arg0: i32) -> (i32, i32, i32) {
    %c0_i32 = arith.constant 0 : i32
    %c0_i32_0 = arith.constant 0 : i32
    %c0_i32_1 = arith.constant 0 : i32
    return %arg0, %c0_i32, %c0_i32_0 : i32, i32, i32
  }
  func.func @transform_3(%arg0: i32) -> (i32, i32, i32) {
    %c0_i32 = arith.constant 0 : i32
    %c0_i32_0 = arith.constant 0 : i32
    %c0_i32_1 = arith.constant 0 : i32
    return %arg0, %c0_i32, %c0_i32_0 : i32, i32, i32
  }
}

</mosaic_0001>

<llo_original>
// kernel: tpu_custom_call.1
$region0: #{tpu_custom_call.1}
  #allocation0 [shape = 'u32[]', space=smem, size = 0x4, offset = 0x4, fixed_abs, tag = 'smem constant byte address 0x4 - core index']
  #allocation1 [shape = 'u32[144,128]{1,0:T(1,128)}', space=vmem, size = 0x12000, scoped, tag = 'internal scratch']
  %s0 = inlined_call_operand.vmem [shape: f32[128,128], index: 0, kind: input, shape index: {}]
  %s1 = inlined_call_operand.vmem [shape: f32[4,128,8], index: 1, kind: input, shape index: {}]
  %s2 = inlined_call_operand.vmem [shape: f32[4,128,8], index: 2, kind: output, shape index: {0}]
  %s3 = inlined_call_operand.vmem [shape: f32[4,128,8], index: 3, kind: output, shape index: {1}]
  %4 = xla_tuple %s2, %s3
  %s5 = sld [smem:[#allocation0]]
  $region49: #{tpu_custom_call.1} parent=0
    _
  %s7 = ssub.s32 1, %s5
  %s8 = scalar_select 0, %s7, %s5
  loop: start=0, step=1, limit=4
  $region2: #{tpu_custom_call.1} parent=0 // loop_pre_header
    _
  $region3: #{tpu_custom_call.1} parent=0 // loop_header
    %s10 = sphi 0, %s14
    %p11 = scmp.ge.s32.totalorder %s10, 4
    %s18 = sphi 0, %s18
    %s20 = sphi 0, %s18
    %s21 = sphi 0, %s20
    %s35 = sphi 0, %s21
    %s41 = sphi 0, %s43
    %s44 = sphi 0, %s41
    %s45 = sphi 0, %s44
    %s61 = sphi 0, %s45
    %s67 = sphi 0, %s69
    %s70 = sphi 0, %s67
    %s71 = sphi 0, %s70
    %s87 = sphi 0, %s71
    %s93 = sphi 0, %s95
    %s96 = sphi 0, %s93
    %s97 = sphi 0, %s96
    %s113 = sphi 0, %s97
  $region4: #{tpu_custom_call.1} parent=0 // loop_header_branch
    %13 = sbr.rel (%p11) target = $region8
  $region5: #{tpu_custom_call.1} parent=0 // loop_body
    %s15 = ssub.s32 %s10, 1
    %s16 = ssub.s32 %s10, 2
    %s17 = sadd.s32 %s10, 1
    %s19 = sadd.s32 %s18, 1
    %p22 = scmp.eq.s32.totalorder %s10, 1
    %p23 = scmp.ne.s32.totalorder %s18, %s20
    %p24 = scmp.eq.s32.totalorder %s10, 0
    %p25 = por %p23, %p24
    %p26 = scmp.ne.s32.totalorder %s18, %s20
    %p27 = scmp.eq.s32.totalorder %s15, 1
    %p28 = por %p26, %p27
    %p29 = scmp.ne.s32.totalorder %s20, %s21
    %p30 = scmp.eq.s32.totalorder %s15, 0
    %p31 = por %p29, %p30
    %p32 = scmp.ne.s32.totalorder %s20, %s21
    %p33 = scmp.eq.s32.totalorder %s16, 1
    %p34 = por %p32, %p33
    %p36 = scmp.ne.s32.totalorder %s21, %s35
    %p37 = scmp.eq.s32.totalorder %s16, 0
    %p38 = por %p36, %p37
    %s39 = ssub.s32 %s10, %s17
    %p40 = scmp.eq.s32.totalorder %s39, 0
    %s42 = sadd.s32 %s41, 1
    %s43 = scalar_select %p40, %s41, %s42
    %p46 = pneg %p40
    %p47 = scmp.eq.s32.totalorder %s10, 1
    %p48 = por %p46, %p47
    %p49 = scmp.ne.s32.totalorder %s41, %s44
    %p50 = scmp.eq.s32.totalorder %s10, 0
    %p51 = por %p49, %p50
    %p52 = scmp.ne.s32.totalorder %s41, %s44
    %p53 = scmp.eq.s32.totalorder %s15, 1
    %p54 = por %p52, %p53
    %p55 = scmp.ne.s32.totalorder %s44, %s45
    %p56 = scmp.eq.s32.totalorder %s15, 0
    %p57 = por %p55, %p56
    %p58 = scmp.ne.s32.totalorder %s44, %s45
    %p59 = scmp.eq.s32.totalorder %s16, 1
    %p60 = por %p58, %p59
    %p62 = scmp.ne.s32.totalorder %s45, %s61
    %p63 = scmp.eq.s32.totalorder %s16, 0
    %p64 = por %p62, %p63
    %s65 = ssub.s32 %s10, %s17
    %p66 = scmp.eq.s32.totalorder %s65, 0
    %s68 = sadd.s32 %s67, 1
    %s69 = scalar_select %p66, %s67, %s68
    %p72 = pneg %p66
    %p73 = scmp.eq.s32.totalorder %s10, 1
    %p74 = por %p72, %p73
    %p75 = scmp.ne.s32.totalorder %s67, %s70
    %p76 = scmp.eq.s32.totalorder %s10, 0
    %p77 = por %p75, %p76
    %p78 = scmp.ne.s32.totalorder %s67, %s70
    %p79 = scmp.eq.s32.totalorder %s15, 1
    %p80 = por %p78, %p79
    %p81 = scmp.ne.s32.totalorder %s70, %s71
    %p82 = scmp.eq.s32.totalorder %s15, 0
    %p83 = por %p81, %p82
    %p84 = scmp.ne.s32.totalorder %s70, %s71
    %p85 = scmp.eq.s32.totalorder %s16, 1
    %p86 = por %p84, %p85
    %p88 = scmp.ne.s32.totalorder %s71, %s87
    %p89 = scmp.eq.s32.totalorder %s16, 0
    %p90 = por %p88, %p89
    %s91 = ssub.s32 %s10, %s17
    %p92 = scmp.eq.s32.totalorder %s91, 0
    %s94 = sadd.s32 %s93, 1
    %s95 = scalar_select %p92, %s93, %s94
    %p98 = pneg %p92
    %p99 = scmp.eq.s32.totalorder %s10, 1
    %p100 = por %p98, %p99
    %p101 = scmp.ne.s32.totalorder %s93, %s96
    %p102 = scmp.eq.s32.totalorder %s10, 0
    %p103 = por %p101, %p102
    %p104 = scmp.ne.s32.totalorder %s93, %s96
    %p105 = scmp.eq.s32.totalorder %s15, 1
    %p106 = por %p104, %p105
    %p107 = scmp.ne.s32.totalorder %s96, %s97
    %p108 = scmp.eq.s32.totalorder %s15, 0
    %p109 = por %p107, %p108
    %p110 = scmp.ne.s32.totalorder %s96, %s97
    %p111 = scmp.eq.s32.totalorder %s16, 1
    %p112 = por %p110, %p111
    %p114 = scmp.ne.s32.totalorder %s97, %s113
    %p115 = scmp.eq.s32.totalorder %s16, 0
    %p116 = por %p114, %p115
    %p117 = scmp.le.s32.totalorder 1, %s10
    %p118 = scmp.lt.s32.totalorder %s10, 3
    %p119 = pnand %p117, %p118
    %p120 = pneg %p119
    // Predicated region
    $region9: #{tpu_custom_call.1} parent=5 // pred_check
      _
    $region10: #{tpu_custom_call.1} parent=5 // pred_check_branch
      %122 = sbr.rel (%p119) target = $region12
    $region11: #{tpu_custom_call.1} parent=5 // pred_region
      %s123 = ssub.s32 %s10, 1
      // Predicated region
      $region13: #{tpu_custom_call.1} parent=11 // pred_check
        %p124 = pneg %p31
      $region14: #{tpu_custom_call.1} parent=11 // pred_check_branch
        %126 = sbr.rel (%p124) target = $region16
      $region15: #{tpu_custom_call.1} parent=11 // pred_region
        _
      $region16: #{tpu_custom_call.1} parent=11 // pred_fallthru
        _
    $region12: #{tpu_custom_call.1} parent=5 // pred_fallthru
      _
    %p127 = scmp.lt.s32.totalorder %s10, 2
    // Predicated region
    $region17: #{tpu_custom_call.1} parent=5 // pred_check
      %p128 = pneg %p127
    $region18: #{tpu_custom_call.1} parent=5 // pred_check_branch
      %130 = sbr.rel (%p128) target = $region20
    $region19: #{tpu_custom_call.1} parent=5 // pred_region
      // Predicated region
      $region21: #{tpu_custom_call.1} parent=19 // pred_check
        %p131 = pneg %p51
      $region22: #{tpu_custom_call.1} parent=19 // pred_check_branch
        %133 = sbr.rel (%p131) target = $region24
      $region23: #{tpu_custom_call.1} parent=19 // pred_region
        %s134 = smul.u32 2, %s10
        %p135 = scmp.lt.s32.totalorder %s134, 3
        %s136 = scalar_select %p135, %s134, 3
        %s137 = smul.addr %s136, 16
        %s138 = smul.addr %s137, 8
        %s139 = scalar_lea.vmem %s1, %s138
        %s140 = smul.u32 2, %s10
      $region24: #{tpu_custom_call.1} parent=19 // pred_fallthru
        _
    $region20: #{tpu_custom_call.1} parent=5 // pred_fallthru
      _
    %p141 = scmp.le.s32.totalorder 1, %s10
    %p142 = scmp.lt.s32.totalorder %s10, 3
    %p143 = pnand %p141, %p142
    %p144 = pneg %p143
    // Predicated region
    $region25: #{tpu_custom_call.1} parent=5 // pred_check
      _
    $region26: #{tpu_custom_call.1} parent=5 // pred_check_branch
      %146 = sbr.rel (%p143) target = $region28
    $region27: #{tpu_custom_call.1} parent=5 // pred_region
      %s147 = ssub.s32 %s10, 1
      %p148 = pneg %p31
      %p149 = pneg %p28
      %s150 = smul.u32 2, %s15
      %p151 = scmp.lt.s32.totalorder %s150, 3
      %s152 = scalar_select %p151, %s150, 3
      %s153 = smul.addr %s152, 16
      %s154 = smul.addr %s153, 8
      %s155 = scalar_lea.vmem %s1, %s154
      %p156 = pneg %p57
      %p157 = pneg %p54
      %p158 = pneg %p83
      %p159 = pneg %p80
      %s160 = smul.u32 2, %s15
      %p161 = scmp.lt.s32.totalorder %s160, 3
      %s162 = scalar_select %p161, %s160, 3
      %s163 = smul.addr %s162, 16
      %s164 = smul.addr %s163, 8
      %s165 = scalar_lea.vmem %s2, %s164
      %p166 = pneg %p109
      %p167 = pneg %p106
      %s168 = smul.u32 2, %s15
      %p169 = scmp.lt.s32.totalorder %s168, 3
      %s170 = scalar_select %p169, %s168, 3
      %s171 = smul.addr %s170, 16
      %s172 = smul.addr %s171, 8
      %s173 = scalar_lea.vmem %s3, %s172
      %s174 = smul.u32 2, %s15
      %p175 = scmp.lt.s32.totalorder %s174, 3
      %s176 = scalar_select %p175, %s174, 3
      %s177 = smul.addr %s176, 16
      %s178 = smul.addr %s177, 8
      %s179 = scalar_lea.vmem %s1, %s178
      %s180 = smul.u32 2, %s15
      %s181 = smul.u32 2, %s15
      %p182 = scmp.lt.s32.totalorder %s181, 3
      %s183 = scalar_select %p182, %s181, 3
      %s184 = smul.addr %s183, 16
      %s185 = smul.addr %s184, 8
      %s186 = scalar_lea.vmem %s2, %s185
      %s187 = smul.u32 2, %s15
      %s188 = smul.u32 2, %s15
      %p189 = scmp.lt.s32.totalorder %s188, 3
      %s190 = scalar_select %p189, %s188, 3
      %s191 = smul.addr %s190, 16
      %s192 = smul.addr %s191, 8
      %s193 = scalar_lea.vmem %s3, %s192
      %s194 = smul.u32 2, %s15
      %v195 = vld [vmem:[%s0] sm:$0xff]
      %v196 = vld [vmem:[%s0 + $0x8] sm:$0xff]
      %v197 = vld [vmem:[%s0 + $0x10] sm:$0xff]
      %v198 = vld [vmem:[%s0 + $0x18] sm:$0xff]
      %v199 = vld [vmem:[%s0 + $0x20] sm:$0xff]
      %v200 = vld [vmem:[%s0 + $0x28] sm:$0xff]
      %v201 = vld [vmem:[%s0 + $0x30] sm:$0xff]
      %v202 = vld [vmem:[%s0 + $0x38] sm:$0xff]
      %v203 = vld [vmem:[%s0 + $0x40] sm:$0xff]
      %v204 = vld [vmem:[%s0 + $0x48] sm:$0xff]
      %v205 = vld [vmem:[%s0 + $0x50] sm:$0xff]
      %v206 = vld [vmem:[%s0 + $0x58] sm:$0xff]
      %v207 = vld [vmem:[%s0 + $0x60] sm:$0xff]
      %v208 = vld [vmem:[%s0 + $0x68] sm:$0xff]
      %v209 = vld [vmem:[%s0 + $0x70] sm:$0xff]
      %v210 = vld [vmem:[%s0 + $0x78] sm:$0xff]
      %v211 = vld [vmem:[%s179] sm:$0xff]
      %v212 = vld [vmem:[%s179 + $0x8] sm:$0xff]
      %v213 = vld [vmem:[%s179 + $0x10] sm:$0xff]
      %v214 = vld [vmem:[%s179 + $0x18] sm:$0xff]
      %v215 = vld [vmem:[%s179 + $0x20] sm:$0xff]
      %v216 = vld [vmem:[%s179 + $0x28] sm:$0xff]
      %v217 = vld [vmem:[%s179 + $0x30] sm:$0xff]
      %v218 = vld [vmem:[%s179 + $0x38] sm:$0xff]
      %v219 = vld [vmem:[%s179 + $0x40] sm:$0xff]
      %v220 = vld [vmem:[%s179 + $0x48] sm:$0xff]
      %v221 = vld [vmem:[%s179 + $0x50] sm:$0xff]
      %v222 = vld [vmem:[%s179 + $0x58] sm:$0xff]
      %v223 = vld [vmem:[%s179 + $0x60] sm:$0xff]
      %v224 = vld [vmem:[%s179 + $0x68] sm:$0xff]
      %v225 = vld [vmem:[%s179 + $0x70] sm:$0xff]
      %v226 = vld [vmem:[%s179 + $0x78] sm:$0xff]
      %227 = vmatprep.subr.mxu0 0.0
      %228 = vmatpush1.msra.mxu0 %v211
      %229 = vmatprep.subr.mxu0 0.0
      %230 = vmatpush1.msra.mxu0 %v212
      %231 = vmatprep.subr.mxu0 0.0
      %232 = vmatpush1.msra.mxu0 %v213
      %233 = vmatprep.subr.mxu0 0.0
      %234 = vmatpush1.msra.mxu0 %v214
      %235 = vmatprep.subr.mxu0 0.0
      %236 = vmatpush1.msra.mxu0 %v215
      %237 = vmatprep.subr.mxu0 0.0
      %238 = vmatpush1.msra.mxu0 %v216
      %239 = vmatprep.subr.mxu0 0.0
      %240 = vmatpush1.msra.mxu0 %v217
      %241 = vmatprep.subr.mxu0 0.0
      %242 = vmatpush1.msra.mxu0 %v218
      %243 = vmatprep.subr.mxu0 0.0
      %244 = vmatpush1.msra.mxu0 %v219
      %245 = vmatprep.subr.mxu0 0.0
      %246 = vmatpush1.msra.mxu0 %v220
      %247 = vmatprep.subr.mxu0 0.0
      %248 = vmatpush1.msra.mxu0 %v221
      %249 = vmatprep.subr.mxu0 0.0
      %250 = vmatpush1.msra.mxu0 %v222
      %251 = vmatprep.subr.mxu0 0.0
      %252 = vmatpush1.msra.mxu0 %v223
      %253 = vmatprep.subr.mxu0 0.0
      %254 = vmatpush1.msra.mxu0 %v224
      %255 = vmatprep.subr.mxu0 0.0
      %256 = vmatpush1.msra.mxu0 %v225
      %257 = vmatprep.subr.mxu0 0.0
      %258 = vmatpush1.msra.mxu0 %v226
      %259 = vmatprep.subr.mxu0 0.0
      %260 = vmatpush1.msra.mxu0 0.0
      %261 = vmatprep.subr.mxu0 0.0
      %262 = vmatpush1.msra.mxu0 0.0
      %263 = vmatprep.subr.mxu0 0.0
      %264 = vmatpush1.msra.mxu0 0.0
      %265 = vmatprep.subr.mxu0 0.0
      %266 = vmatpush1.msra.mxu0 0.0
      %267 = vmatprep.subr.mxu0 0.0
      %268 = vmatpush1.msra.mxu0 0.0
      %269 = vmatprep.subr.mxu0 0.0
      %270 = vmatpush1.msra.mxu0 0.0
      %271 = vmatprep.subr.mxu0 0.0
      %272 = vmatpush1.msra.mxu0 0.0
      %273 = vmatprep.subr.mxu0 0.0
      %274 = vmatpush1.msra.mxu0 0.0
      %275 = vmatprep.subr.mxu0 0.0
      %276 = vmatpush1.msra.mxu0 0.0
      %277 = vmatprep.subr.mxu0 0.0
      %278 = vmatpush1.msra.mxu0 0.0
      %279 = vmatprep.subr.mxu0 0.0
      %280 = vmatpush1.msra.mxu0 0.0
      %281 = vmatprep.subr.mxu0 0.0
      %282 = vmatpush1.msra.mxu0 0.0
      %283 = vmatprep.subr.mxu0 0.0
      %284 = vmatpush1.msra.mxu0 0.0
      %285 = vmatprep.subr.mxu0 0.0
      %286 = vmatpush1.msra.mxu0 0.0
      %287 = vmatprep.subr.mxu0 0.0
      %288 = vmatpush1.msra.mxu0 0.0
      %289 = vmatprep.subr.mxu0 0.0
      %290 = vmatpush1.msra.mxu0 0.0
      %291 = vmatprep.mubr.f32.mxu0 0.0
      %292 = vmatmul.mubr.f32.gmra.mrb[0].mxu0 %v195
      %v293 = vpop.f32.mrb[0].mxu0
      %v294 = vadd.f32 0.0, %v293
      %v295 = vpop.f32.mrb[0].mxu0
      %296 = vmatprep.mubr.f32.mxu0 0.0
      %297 = vmatmul.mubr.f32.gmra.mrb[0].mxu0 %v196
      %v298 = vpop.f32.mrb[0].mxu0
      %v299 = vadd.f32 0.0, %v298
      %v300 = vpop.f32.mrb[0].mxu0
      %301 = vmatprep.mubr.f32.mxu0 0.0
      %302 = vmatmul.mubr.f32.gmra.mrb[0].mxu0 %v197
      %v303 = vpop.f32.mrb[0].mxu0
      %v304 = vadd.f32 0.0, %v303
      %v305 = vpop.f32.mrb[0].mxu0
      %306 = vmatprep.mubr.f32.mxu0 0.0
      %307 = vmatmul.mubr.f32.gmra.mrb[0].mxu0 %v198
      %v308 = vpop.f32.mrb[0].mxu0
      %v309 = vadd.f32 0.0, %v308
      %v310 = vpop.f32.mrb[0].mxu0
      %311 = vmatprep.mubr.f32.mxu0 0.0
      %312 = vmatmul.mubr.f32.gmra.mrb[0].mxu0 %v199
      %v313 = vpop.f32.mrb[0].mxu0
      %v314 = vadd.f32 0.0, %v313
      %v315 = vpop.f32.mrb[0].mxu0
      %316 = vmatprep.mubr.f32.mxu0 0.0
      %317 = vmatmul.mubr.f32.gmra.mrb[0].mxu0 %v200
      %v318 = vpop.f32.mrb[0].mxu0
      %v319 = vadd.f32 0.0, %v318
      %v320 = vpop.f32.mrb[0].mxu0
      %321 = vmatprep.mubr.f32.mxu0 0.0
      %322 = vmatmul.mubr.f32.gmra.mrb[0].mxu0 %v201
      %v323 = vpop.f32.mrb[0].mxu0
      %v324 = vadd.f32 0.0, %v323
      %v325 = vpop.f32.mrb[0].mxu0
      %326 = vmatprep.mubr.f32.mxu0 0.0
      %327 = vmatmul.mubr.f32.gmra.mrb[0].mxu0 %v202
      %v328 = vpop.f32.mrb[0].mxu0
      %v329 = vadd.f32 0.0, %v328
      %v330 = vpop.f32.mrb[0].mxu0
      %331 = vmatprep.mubr.f32.mxu0 0.0
      %332 = vmatmul.mubr.f32.gmra.mrb[0].mxu0 %v203
      %v333 = vpop.f32.mrb[0].mxu0
      %v334 = vadd.f32 0.0, %v333
      %v335 = vpop.f32.mrb[0].mxu0
      %336 = vmatprep.mubr.f32.mxu0 0.0
      %337 = vmatmul.mubr.f32.gmra.mrb[0].mxu0 %v204
      %v338 = vpop.f32.mrb[0].mxu0
      %v339 = vadd.f32 0.0, %v338
      %v340 = vpop.f32.mrb[0].mxu0
      %341 = vmatprep.mubr.f32.mxu0 0.0
      %342 = vmatmul.mubr.f32.gmra.mrb[0].mxu0 %v205
      %v343 = vpop.f32.mrb[0].mxu0
      %v344 = vadd.f32 0.0, %v343
      %v345 = vpop.f32.mrb[0].mxu0
      %346 = vmatprep.mubr.f32.mxu0 0.0
      %347 = vmatmul.mubr.f32.gmra.mrb[0].mxu0 %v206
      %v348 = vpop.f32.mrb[0].mxu0
      %v349 = vadd.f32 0.0, %v348
      %v350 = vpop.f32.mrb[0].mxu0
      %351 = vmatprep.mubr.f32.mxu0 0.0
      %352 = vmatmul.mubr.f32.gmra.mrb[0].mxu0 %v207
      %v353 = vpop.f32.mrb[0].mxu0
      %v354 = vadd.f32 0.0, %v353
      %v355 = vpop.f32.mrb[0].mxu0
      %356 = vmatprep.mubr.f32.mxu0 0.0
      %357 = vmatmul.mubr.f32.gmra.mrb[0].mxu0 %v208
      %v358 = vpop.f32.mrb[0].mxu0
      %v359 = vadd.f32 0.0, %v358
      %v360 = vpop.f32.mrb[0].mxu0
      %361 = vmatprep.mubr.f32.mxu0 0.0
      %362 = vmatmul.mubr.f32.gmra.mrb[0].mxu0 %v209
      %v363 = vpop.f32.mrb[0].mxu0
      %v364 = vadd.f32 0.0, %v363
      %v365 = vpop.f32.mrb[0].mxu0
      %366 = vmatprep.mubr.f32.mxu0 0.0
      %367 = vmatmul.mubr.f32.gmra.mrb[0].mxu0 %v210
      %v368 = vpop.f32.mrb[0].mxu0
      %v369 = vadd.f32 0.0, %v368
      %v370 = vpop.f32.mrb[0].mxu0
      %371 = vdwg.mxu0
      %vm372 = vcmask 64512
      %373 = vst.msk [vmem:[%s193] sm:$0xff] %vm372, %v294
      %374 = vst.msk [vmem:[%s193 + $0x8] sm:$0xff] %vm372, %v299
      %375 = vst.msk [vmem:[%s193 + $0x10] sm:$0xff] %vm372, %v304
      %376 = vst.msk [vmem:[%s193 + $0x18] sm:$0xff] %vm372, %v309
      %377 = vst.msk [vmem:[%s193 + $0x20] sm:$0xff] %vm372, %v314
      %378 = vst.msk [vmem:[%s193 + $0x28] sm:$0xff] %vm372, %v319
      %379 = vst.msk [vmem:[%s193 + $0x30] sm:$0xff] %vm372, %v324
      %380 = vst.msk [vmem:[%s193 + $0x38] sm:$0xff] %vm372, %v329
      %381 = vst.msk [vmem:[%s193 + $0x40] sm:$0xff] %vm372, %v334
      %382 = vst.msk [vmem:[%s193 + $0x48] sm:$0xff] %vm372, %v339
      %383 = vst.msk [vmem:[%s193 + $0x50] sm:$0xff] %vm372, %v344
      %384 = vst.msk [vmem:[%s193 + $0x58] sm:$0xff] %vm372, %v349
      %385 = vst.msk [vmem:[%s193 + $0x60] sm:$0xff] %vm372, %v354
      %386 = vst.msk [vmem:[%s193 + $0x68] sm:$0xff] %vm372, %v359
      %387 = vst.msk [vmem:[%s193 + $0x70] sm:$0xff] %vm372, %v364
      %388 = vst.msk [vmem:[%s193 + $0x78] sm:$0xff] %vm372, %v369
      %v389 = vsub.f32 %v211, %v294
      %v390 = vsub.f32 %v212, %v299
      %v391 = vsub.f32 %v213, %v304
      %v392 = vsub.f32 %v214, %v309
      %v393 = vsub.f32 %v215, %v314
      %v394 = vsub.f32 %v216, %v319
      %v395 = vsub.f32 %v217, %v324
      %v396 = vsub.f32 %v218, %v329
      %v397 = vsub.f32 %v219, %v334
      %v398 = vsub.f32 %v220, %v339
      %v399 = vsub.f32 %v221, %v344
      %v400 = vsub.f32 %v222, %v349
      %v401 = vsub.f32 %v223, %v354
      %v402 = vsub.f32 %v224, %v359
      %v403 = vsub.f32 %v225, %v364
      %v404 = vsub.f32 %v226, %v369
      %405 = vst.msk [vmem:[%s186] sm:$0xff] %vm372, %v389
      %406 = vst.msk [vmem:[%s186 + $0x8] sm:$0xff] %vm372, %v390
      %407 = vst.msk [vmem:[%s186 + $0x10] sm:$0xff] %vm372, %v391
      %408 = vst.msk [vmem:[%s186 + $0x18] sm:$0xff] %vm372, %v392
      %409 = vst.msk [vmem:[%s186 + $0x20] sm:$0xff] %vm372, %v393
      %410 = vst.msk [vmem:[%s186 + $0x28] sm:$0xff] %vm372, %v394
      %411 = vst.msk [vmem:[%s186 + $0x30] sm:$0xff] %vm372, %v395
      %412 = vst.msk [vmem:[%s186 + $0x38] sm:$0xff] %vm372, %v396
      %413 = vst.msk [vmem:[%s186 + $0x40] sm:$0xff] %vm372, %v397
      %414 = vst.msk [vmem:[%s186 + $0x48] sm:$0xff] %vm372, %v398
      %415 = vst.msk [vmem:[%s186 + $0x50] sm:$0xff] %vm372, %v399
      %416 = vst.msk [vmem:[%s186 + $0x58] sm:$0xff] %vm372, %v400
      %417 = vst.msk [vmem:[%s186 + $0x60] sm:$0xff] %vm372, %v401
      %418 = vst.msk [vmem:[%s186 + $0x68] sm:$0xff] %vm372, %v402
      %419 = vst.msk [vmem:[%s186 + $0x70] sm:$0xff] %vm372, %v403
      %420 = vst.msk [vmem:[%s186 + $0x78] sm:$0xff] %vm372, %v404
      %s421 = scalar_lea.vmem %s179, 128
      %v422 = vld [vmem:[%s421] sm:$0xff]
      %v423 = vld [vmem:[%s421 + $0x8] sm:$0xff]
      %v424 = vld [vmem:[%s421 + $0x10] sm:$0xff]
      %v425 = vld [vmem:[%s421 + $0x18] sm:$0xff]
      %v426 = vld [vmem:[%s421 + $0x20] sm:$0xff]
      %v427 = vld [vmem:[%s421 + $0x28] sm:$0xff]
      %v428 = vld [vmem:[%s421 + $0x30] sm:$0xff]
      %v429 = vld [vmem:[%s421 + $0x38] sm:$0xff]
      %v430 = vld [vmem:[%s421 + $0x40] sm:$0xff]
      %v431 = vld [vmem:[%s421 + $0x48] sm:$0xff]
      %v432 = vld [vmem:[%s421 + $0x50] sm:$0xff]
      %v433 = vld [vmem:[%s421 + $0x58] sm:$0xff]
      %v434 = vld [vmem:[%s421 + $0x60] sm:$0xff]
      %v435 = vld [vmem:[%s421 + $0x68] sm:$0xff]
      %v436 = vld [vmem:[%s421 + $0x70] sm:$0xff]
      %v437 = vld [vmem:[%s421 + $0x78] sm:$0xff]
      %438 = vmatprep.subr.mxu0 0.0
      %439 = vmatpush1.msra.mxu0 %v422
      %440 = vmatprep.subr.mxu0 0.0
      %441 = vmatpush1.msra.mxu0 %v423
      %442 = vmatprep.subr.mxu0 0.0
      %443 = vmatpush1.msra.mxu0 %v424
      %444 = vmatprep.subr.mxu0 0.0
      %445 = vmatpush1.msra.mxu0 %v425
      %446 = vmatprep.subr.mxu0 0.0
      %447 = vmatpush1.msra.mxu0 %v426
      %448 = vmatprep.subr.mxu0 0.0
      %449 = vmatpush1.msra.mxu0 %v427
      %450 = vmatprep.subr.mxu0 0.0
      %451 = vmatpush1.msra.mxu0 %v428
      %452 = vmatprep.subr.mxu0 0.0
      %453 = vmatpush1.msra.mxu0 %v429
      %454 = vmatprep.subr.mxu0 0.0
      %455 = vmatpush1.msra.mxu0 %v430
      %456 = vmatprep.subr.mxu0 0.0
      %457 = vmatpush1.msra.mxu0 %v431
      %458 = vmatprep.subr.mxu0 0.0
      %459 = vmatpush1.msra.mxu0 %v432
      %460 = vmatprep.subr.mxu0 0.0
      %461 = vmatpush1.msra.mxu0 %v433
      %462 = vmatprep.subr.mxu0 0.0
      %463 = vmatpush1.msra.mxu0 %v434
      %464 = vmatprep.subr.mxu0 0.0
      %465 = vmatpush1.msra.mxu0 %v435
      %466 = vmatprep.subr.mxu0 0.0
      %467 = vmatpush1.msra.mxu0 %v436
      %468 = vmatprep.subr.mxu0 0.0
      %469 = vmatpush1.msra.mxu0 %v437
      %470 = vmatprep.subr.mxu0 0.0
      %471 = vmatpush1.msra.mxu0 0.0
      %472 = vmatprep.subr.mxu0 0.0
      %473 = vmatpush1.msra.mxu0 0.0
      %474 = vmatprep.subr.mxu0 0.0
      %475 = vmatpush1.msra.mxu0 0.0
      %476 = vmatprep.subr.mxu0 0.0
      %477 = vmatpush1.msra.mxu0 0.0
      %478 = vmatprep.subr.mxu0 0.0
      %479 = vmatpush1.msra.mxu0 0.0
      %480 = vmatprep.subr.mxu0 0.0
      %481 = vmatpush1.msra.mxu0 0.0
      %482 = vmatprep.subr.mxu0 0.0
      %483 = vmatpush1.msra.mxu0 0.0
      %484 = vmatprep.subr.mxu0 0.0
      %485 = vmatpush1.msra.mxu0 0.0
      %486 = vmatprep.subr.mxu0 0.0
      %487 = vmatpush1.msra.mxu0 0.0
      %488 = vmatprep.subr.mxu0 0.0
      %489 = vmatpush1.msra.mxu0 0.0
      %490 = vmatprep.subr.mxu0 0.0
      %491 = vmatpush1.msra.mxu0 0.0
      %492 = vmatprep.subr.mxu0 0.0
      %493 = vmatpush1.msra.mxu0 0.0
      %494 = vmatprep.subr.mxu0 0.0
      %495 = vmatpush1.msra.mxu0 0.0
      %496 = vmatprep.subr.mxu0 0.0
      %497 = vmatpush1.msra.mxu0 0.0
      %498 = vmatprep.subr.mxu0 0.0
      %499 = vmatpush1.msra.mxu0 0.0
      %500 = vmatprep.subr.mxu0 0.0
      %501 = vmatpush1.msra.mxu0 0.0
      %502 = vmatprep.mubr.f32.mxu0 0.0
      %503 = vmatmul.mubr.f32.gmra.mrb[0].mxu0 %v195
      %v504 = vpop.f32.mrb[0].mxu0
      %v505 = vadd.f32 0.0, %v504
      %v506 = vpop.f32.mrb[0].mxu0
      %507 = vmatprep.mubr.f32.mxu0 0.0
      %508 = vmatmul.mubr.f32.gmra.mrb[0].mxu0 %v196
      %v509 = vpop.f32.mrb[0].mxu0
      %v510 = vadd.f32 0.0, %v509
      %v511 = vpop.f32.mrb[0].mxu0
      %512 = vmatprep.mubr.f32.mxu0 0.0
      %513 = vmatmul.mubr.f32.gmra.mrb[0].mxu0 %v197
      %v514 = vpop.f32.mrb[0].mxu0
      %v515 = vadd.f32 0.0, %v514
      %v516 = vpop.f32.mrb[0].mxu0
      %517 = vmatprep.mubr.f32.mxu0 0.0
      %518 = vmatmul.mubr.f32.gmra.mrb[0].mxu0 %v198
      %v519 = vpop.f32.mrb[0].mxu0
      %v520 = vadd.f32 0.0, %v519
      %v521 = vpop.f32.mrb[0].mxu0
      %522 = vmatprep.mubr.f32.mxu0 0.0
      %523 = vmatmul.mubr.f32.gmra.mrb[0].mxu0 %v199
      %v524 = vpop.f32.mrb[0].mxu0
      %v525 = vadd.f32 0.0, %v524
      %v526 = vpop.f32.mrb[0].mxu0
      %527 = vmatprep.mubr.f32.mxu0 0.0
      %528 = vmatmul.mubr.f32.gmra.mrb[0].mxu0 %v200
      %v529 = vpop.f32.mrb[0].mxu0
      %v530 = vadd.f32 0.0, %v529
      %v531 = vpop.f32.mrb[0].mxu0
      %532 = vmatprep.mubr.f32.mxu0 0.0
      %533 = vmatmul.mubr.f32.gmra.mrb[0].mxu0 %v201
      %v534 = vpop.f32.mrb[0].mxu0
      %v535 = vadd.f32 0.0, %v534
      %v536 = vpop.f32.mrb[0].mxu0
      %537 = vmatprep.mubr.f32.mxu0 0.0
      %538 = vmatmul.mubr.f32.gmra.mrb[0].mxu0 %v202
      %v539 = vpop.f32.mrb[0].mxu0
      %v540 = vadd.f32 0.0, %v539
      %v541 = vpop.f32.mrb[0].mxu0
      %542 = vmatprep.mubr.f32.mxu0 0.0
      %543 = vmatmul.mubr.f32.gmra.mrb[0].mxu0 %v203
      %v544 = vpop.f32.mrb[0].mxu0
      %v545 = vadd.f32 0.0, %v544
      %v546 = vpop.f32.mrb[0].mxu0
      %547 = vmatprep.mubr.f32.mxu0 0.0
      %548 = vmatmul.mubr.f32.gmra.mrb[0].mxu0 %v204
      %v549 = vpop.f32.mrb[0].mxu0
      %v550 = vadd.f32 0.0, %v549
      %v551 = vpop.f32.mrb[0].mxu0
      %552 = vmatprep.mubr.f32.mxu0 0.0
      %553 = vmatmul.mubr.f32.gmra.mrb[0].mxu0 %v205
      %v554 = vpop.f32.mrb[0].mxu0
      %v555 = vadd.f32 0.0, %v554
      %v556 = vpop.f32.mrb[0].mxu0
      %557 = vmatprep.mubr.f32.mxu0 0.0
      %558 = vmatmul.mubr.f32.gmra.mrb[0].mxu0 %v206
      %v559 = vpop.f32.mrb[0].mxu0
      %v560 = vadd.f32 0.0, %v559
      %v561 = vpop.f32.mrb[0].mxu0
      %562 = vmatprep.mubr.f32.mxu0 0.0
      %563 = vmatmul.mubr.f32.gmra.mrb[0].mxu0 %v207
      %v564 = vpop.f32.mrb[0].mxu0
      %v565 = vadd.f32 0.0, %v564
      %v566 = vpop.f32.mrb[0].mxu0
      %567 = vmatprep.mubr.f32.mxu0 0.0
      %568 = vmatmul.mubr.f32.gmra.mrb[0].mxu0 %v208
      %v569 = vpop.f32.mrb[0].mxu0
      %v570 = vadd.f32 0.0, %v569
      %v571 = vpop.f32.mrb[0].mxu0
      %572 = vmatprep.mubr.f32.mxu0 0.0
      %573 = vmatmul.mubr.f32.gmra.mrb[0].mxu0 %v209
      %v574 = vpop.f32.mrb[0].mxu0
      %v575 = vadd.f32 0.0, %v574
      %v576 = vpop.f32.mrb[0].mxu0
      %577 = vmatprep.mubr.f32.mxu0 0.0
      %578 = vmatmul.mubr.f32.gmra.mrb[0].mxu0 %v210
      %v579 = vpop.f32.mrb[0].mxu0
      %v580 = vadd.f32 0.0, %v579
      %v581 = vpop.f32.mrb[0].mxu0
      %582 = vdwg.mxu0
      %s583 = scalar_lea.vmem %s193, 128
      %584 = vst.msk [vmem:[%s583] sm:$0xff] %vm372, %v505
      %585 = vst.msk [vmem:[%s583 + $0x8] sm:$0xff] %vm372, %v510
      %586 = vst.msk [vmem:[%s583 + $0x10] sm:$0xff] %vm372, %v515
      %587 = vst.msk [vmem:[%s583 + $0x18] sm:$0xff] %vm372, %v520
      %588 = vst.msk [vmem:[%s583 + $0x20] sm:$0xff] %vm372, %v525
      %589 = vst.msk [vmem:[%s583 + $0x28] sm:$0xff] %vm372, %v530
      %590 = vst.msk [vmem:[%s583 + $0x30] sm:$0xff] %vm372, %v535
      %591 = vst.msk [vmem:[%s583 + $0x38] sm:$0xff] %vm372, %v540
      %592 = vst.msk [vmem:[%s583 + $0x40] sm:$0xff] %vm372, %v545
      %593 = vst.msk [vmem:[%s583 + $0x48] sm:$0xff] %vm372, %v550
      %594 = vst.msk [vmem:[%s583 + $0x50] sm:$0xff] %vm372, %v555
      %595 = vst.msk [vmem:[%s583 + $0x58] sm:$0xff] %vm372, %v560
      %596 = vst.msk [vmem:[%s583 + $0x60] sm:$0xff] %vm372, %v565
      %597 = vst.msk [vmem:[%s583 + $0x68] sm:$0xff] %vm372, %v570
      %598 = vst.msk [vmem:[%s583 + $0x70] sm:$0xff] %vm372, %v575
      %599 = vst.msk [vmem:[%s583 + $0x78] sm:$0xff] %vm372, %v580
      %v600 = vsub.f32 %v422, %v505
      %v601 = vsub.f32 %v423, %v510
      %v602 = vsub.f32 %v424, %v515
      %v603 = vsub.f32 %v425, %v520
      %v604 = vsub.f32 %v426, %v525
      %v605 = vsub.f32 %v427, %v530
      %v606 = vsub.f32 %v428, %v535
      %v607 = vsub.f32 %v429, %v540
      %v608 = vsub.f32 %v430, %v545
      %v609 = vsub.f32 %v431, %v550
      %v610 = vsub.f32 %v432, %v555
      %v611 = vsub.f32 %v433, %v560
      %v612 = vsub.f32 %v434, %v565
      %v613 = vsub.f32 %v435, %v570
      %v614 = vsub.f32 %v436, %v575
      %v615 = vsub.f32 %v437, %v580
      %s616 = scalar_lea.vmem %s186, 128
      %617 = vst.msk [vmem:[%s616] sm:$0xff] %vm372, %v600
      %618 = vst.msk [vmem:[%s616 + $0x8] sm:$0xff] %vm372, %v601
      %619 = vst.msk [vmem:[%s616 + $0x10] sm:$0xff] %vm372, %v602
      %620 = vst.msk [vmem:[%s616 + $0x18] sm:$0xff] %vm372, %v603
      %621 = vst.msk [vmem:[%s616 + $0x20] sm:$0xff] %vm372, %v604
      %622 = vst.msk [vmem:[%s616 + $0x28] sm:$0xff] %vm372, %v605
      %623 = vst.msk [vmem:[%s616 + $0x30] sm:$0xff] %vm372, %v606
      %624 = vst.msk [vmem:[%s616 + $0x38] sm:$0xff] %vm372, %v607
      %625 = vst.msk [vmem:[%s616 + $0x40] sm:$0xff] %vm372, %v608
      %626 = vst.msk [vmem:[%s616 + $0x48] sm:$0xff] %vm372, %v609
      %627 = vst.msk [vmem:[%s616 + $0x50] sm:$0xff] %vm372, %v610
      %628 = vst.msk [vmem:[%s616 + $0x58] sm:$0xff] %vm372, %v611
      %629 = vst.msk [vmem:[%s616 + $0x60] sm:$0xff] %vm372, %v612
      %630 = vst.msk [vmem:[%s616 + $0x68] sm:$0xff] %vm372, %v613
      %631 = vst.msk [vmem:[%s616 + $0x70] sm:$0xff] %vm372, %v614
      %632 = vst.msk [vmem:[%s616 + $0x78] sm:$0xff] %vm372, %v615
      %s633 = smul.u32 2, %s15
      %p634 = scmp.lt.s32.totalorder %s633, 3
      %s635 = scalar_select %p634, %s633, 3
      %s636 = smul.addr %s635, 16
      %s637 = smul.addr %s636, 8
      %s638 = scalar_lea.vmem %s2, %s637
      %s639 = smul.u32 2, %s15
      %p640 = scmp.lt.s32.totalorder %s639, 3
      %s641 = scalar_select %p640, %s639, 3
      %s642 = smul.addr %s641, 16
      %s643 = smul.addr %s642, 8
      %s644 = scalar_lea.vmem %s3, %s643
      // Predicated region
      $region29: #{tpu_custom_call.1} parent=27 // pred_check
        %p645 = pneg %p80
      $region30: #{tpu_custom_call.1} parent=27 // pred_check_branch
        %647 = sbr.rel (%p645) target = $region32
      $region31: #{tpu_custom_call.1} parent=27 // pred_region
        %s648 = smul.u32 2, %s15
      $region32: #{tpu_custom_call.1} parent=27 // pred_fallthru
        _
      // Predicated region
      $region33: #{tpu_custom_call.1} parent=27 // pred_check
        %p649 = pneg %p106
      $region34: #{tpu_custom_call.1} parent=27 // pred_check_branch
        %651 = sbr.rel (%p649) target = $region36
      $region35: #{tpu_custom_call.1} parent=27 // pred_region
        %s652 = smul.u32 2, %s15
      $region36: #{tpu_custom_call.1} parent=27 // pred_fallthru
        _
    $region28: #{tpu_custom_call.1} parent=5 // pred_fallthru
      _
    %p653 = scmp.le.s32.totalorder 2, %s10
    // Predicated region
    $region37: #{tpu_custom_call.1} parent=5 // pred_check
      %p654 = pneg %p653
    $region38: #{tpu_custom_call.1} parent=5 // pred_check_branch
      %656 = sbr.rel (%p654) target = $region40
    $region39: #{tpu_custom_call.1} parent=5 // pred_region
      %s657 = ssub.s32 %s10, 2
      // Predicated region
      $region41: #{tpu_custom_call.1} parent=39 // pred_check
        %p658 = pneg %p86
      $region42: #{tpu_custom_call.1} parent=39 // pred_check_branch
        %660 = sbr.rel (%p658) target = $region44
      $region43: #{tpu_custom_call.1} parent=39 // pred_region
        %s661 = smul.u32 2, %s16
        %p662 = scmp.lt.s32.totalorder %s661, 3
        %s663 = scalar_select %p662, %s661, 3
        %s664 = smul.addr %s663, 16
        %s665 = smul.addr %s664, 8
        %s666 = scalar_lea.vmem %s2, %s665
      $region44: #{tpu_custom_call.1} parent=39 // pred_fallthru
        _
      // Predicated region
      $region45: #{tpu_custom_call.1} parent=39 // pred_check
        %p667 = pneg %p112
      $region46: #{tpu_custom_call.1} parent=39 // pred_check_branch
        %669 = sbr.rel (%p667) target = $region48
      $region47: #{tpu_custom_call.1} parent=39 // pred_region
        %s670 = smul.u32 2, %s16
        %p671 = scmp.lt.s32.totalorder %s670, 3
        %s672 = scalar_select %p671, %s670, 3
        %s673 = smul.addr %s672, 16
        %s674 = smul.addr %s673, 8
        %s675 = scalar_lea.vmem %s3, %s674
      $region48: #{tpu_custom_call.1} parent=39 // pred_fallthru
        _
    $region40: #{tpu_custom_call.1} parent=5 // pred_fallthru
      _
  $region6: #{tpu_custom_call.1} parent=0 // loop_footer
    %s14 = sadd.s32 1, %s10
  $region7: #{tpu_custom_call.1} parent=0 // loop_footer_branch
    %9 = sbr.rel target = $region3
  $region8: #{tpu_custom_call.1} parent=0 // loop_exit
    _

</llo_original>
